<compile_context>
chip_gen: v7x
topology: tpu7x:2x2x1
jax: 0.10.0
libtpu: 0.0.40
codegen_flags: <defaults>
</compile_context>

<pallas_src>
import jax
import jax.numpy as jnp
from jax.experimental import pallas as pl
from jax.experimental.pallas import tpu as pltpu


def _pam_kernel(xq_ref, xk_ref, wb_ref, bb_ref, wcd_ref, bcd_ref, alpha_ref,
                o_ref, fb_s, m_s, l_s, acc_s):
    # Blocks (channels-first):
    #   xq_ref : (1, C, TQ)  query-position tile of x
    #   xk_ref : (1, C, TK)  key-position tile of x
    #   wb_ref : (C, C)      conv_b weight
    #   bb_ref : (C, 1)      conv_b bias
    #   wcd_ref: (2C, C)     fused [conv_c; conv_d] weights
    #   bcd_ref: (2C, 1)     fused [conv_c; conv_d] biases
    #   alpha  : (1, 1)      scalar in SMEM
    #   o_ref  : (1, C, TQ)
    # Scratch (persists across the key-tile axis):
    #   fb_s (C, TQ), m_s (1, TQ), l_s (1, TQ), acc_s (C, TQ)
    C = wb_ref.shape[0]
    k_idx = pl.program_id(2)
    n_k = pl.num_programs(2)

    @pl.when(k_idx == 0)
    def _init():
        xq = xq_ref[0]                                               # (C, TQ)
        fb_s[...] = (jnp.dot(wb_ref[...], xq,
                             preferred_element_type=jnp.float32)
                     + bb_ref[...])
        m_s[...] = jnp.full(m_s.shape, -jnp.inf, dtype=jnp.float32)
        l_s[...] = jnp.zeros(l_s.shape, dtype=jnp.float32)
        acc_s[...] = jnp.zeros(acc_s.shape, dtype=jnp.float32)

    # Fused conv_c / conv_d on the key tile: one pass over x_k, one MXU matmul.
    xk = xk_ref[0]                                                   # (C, TK)
    fcd = (jnp.dot(wcd_ref[...], xk, preferred_element_type=jnp.float32)
           + bcd_ref[...])                                           # (2C, TK)
    fc = fcd[:C]                                                     # (C, TK)
    fd = fcd[C:]                                                     # (C, TK)

    # s[m, n] = <fc[:, m], fb[:, n]>  — keys on sublanes, queries on lanes.
    # Contract channel dims directly (no explicit transpose materialized).
    s = jax.lax.dot_general(fc, fb_s[...], (((0,), (0,)), ((), ())),
                            preferred_element_type=jnp.float32)      # (TK, TQ)

    # Online softmax over the key axis (axis 0).
    m_prev = m_s[...]
    m_new = jnp.maximum(m_prev, jnp.max(s, axis=0, keepdims=True))   # (1, TQ)
    corr = jnp.exp(m_prev - m_new)                                   # (1, TQ)
    p = jnp.exp(s - m_new)                                           # (TK, TQ)
    l_s[...] = corr * l_s[...] + jnp.sum(p, axis=0, keepdims=True)
    acc_s[...] = corr * acc_s[...] + jnp.dot(
        fd, p, preferred_element_type=jnp.float32)                   # (C, TQ)
    m_s[...] = m_new

    @pl.when(k_idx == n_k - 1)
    def _finalize():
        inv_l = pl.reciprocal(l_s[...], approx=True)                 # (1, TQ)
        scale = alpha_ref[0, 0] * inv_l                              # (1, TQ)
        o_ref[0] = acc_s[...] * scale + xq_ref[0]


def _pick_tile(hw):
    # Largest of (512, 256, 128) dividing HW while keeping >= 2 tiles
    # (so both v7x TensorCores get grid steps and the pipeline has depth).
    for t in (512, 256, 128):
        if hw % t == 0 and hw // t >= 2:
            return t
    for t in (512, 256, 128):
        if hw % t == 0:
            return t
    return hw


@jax.jit
def position_attention(x_nchw, wb, bb, wc, bc, wd, bd, alpha):
    """x_nchw: (B, C, H, W) f32; conv weights: (C, C, 1, 1); biases: (C,)."""
    B, C, H, W = x_nchw.shape
    HW = H * W
    x = x_nchw.reshape(B, C, HW).astype(jnp.float32)     # channels-first, free

    tq = _pick_tile(HW)
    tk = tq

    wb2 = wb.reshape(C, C).astype(jnp.float32)
    wcd = jnp.concatenate([wc.reshape(C, C), wd.reshape(C, C)],
                          axis=0).astype(jnp.float32)                 # (2C, C)
    bb2 = bb.reshape(C, 1).astype(jnp.float32)
    bcd = jnp.concatenate([bc.reshape(C), bd.reshape(C)],
                          axis=0).reshape(2 * C, 1).astype(jnp.float32)
    alpha2 = jnp.asarray(alpha, jnp.float32).reshape(1, 1)

    grid = (B, HW // tq, HW // tk)

    out = pl.pallas_call(
        _pam_kernel,
        out_shape=jax.ShapeDtypeStruct((B, C, HW), jnp.float32),
        grid_spec=pltpu.PrefetchScalarGridSpec(
            num_scalar_prefetch=0,
            grid=grid,
            in_specs=[
                pl.BlockSpec((1, C, tq), lambda b, q, k: (b, 0, q)),      # x (query tile)
                pl.BlockSpec((1, C, tk), lambda b, q, k: (b, 0, k)),      # x (key tile)
                pl.BlockSpec((C, C), lambda b, q, k: (0, 0)),             # Wb
                pl.BlockSpec((C, 1), lambda b, q, k: (0, 0)),             # bb
                pl.BlockSpec((2 * C, C), lambda b, q, k: (0, 0)),         # [Wc; Wd]
                pl.BlockSpec((2 * C, 1), lambda b, q, k: (0, 0)),         # [bc; bd]
                pl.BlockSpec(memory_space=pltpu.MemorySpace.SMEM),        # alpha
            ],
            out_specs=pl.BlockSpec((1, C, tq), lambda b, q, k: (b, 0, q)),
            scratch_shapes=[
                pltpu.VMEM((C, tq), jnp.float32),    # fb (query-tile features)
                pltpu.VMEM((1, tq), jnp.float32),    # running max
                pltpu.VMEM((1, tq), jnp.float32),    # running sum
                pltpu.VMEM((C, tq), jnp.float32),    # output accumulator
            ],
        ),
        compiler_params=pltpu.CompilerParams(
            dimension_semantics=("parallel", "parallel", "arbitrary"),
            vmem_limit_bytes=32 * 1024 * 1024,
        ),
    )(x, x, wb2, bb2, wcd, bcd, alpha2)

    return out.reshape(B, C, H, W)


def _reference(x, wb, bb, wc, bc, wd, bd, alpha):
    """Pure-jnp reference mirroring the torch module (NCHW)."""
    B, C, H, W = x.shape
    HW = H * W
    W_b, W_c, W_d = wb.reshape(C, C), wc.reshape(C, C), wd.reshape(C, C)
    xf = x.reshape(B, C, HW)
    fb = jnp.einsum('oc,bcn->bon', W_b, xf) + bb[None, :, None]   # (B, C, HW)
    fc = jnp.einsum('oc,bcn->bon', W_c, xf) + bc[None, :, None]
    fd = jnp.einsum('oc,bcn->bon', W_d, xf) + bd[None, :, None]
    feat_b = jnp.transpose(fb, (0, 2, 1))                         # (B, HW, C)
    s = jnp.einsum('bnc,bcm->bnm', feat_b, fc)                    # (B, HW, HW)
    a = jax.nn.softmax(s, axis=-1)
    e = jnp.einsum('bcm,bnm->bcn', fd, a).reshape(B, C, H, W)
    return alpha * e + x


if __name__ == "__main__":
    B, C, H, W = 2, 8, 16, 16
    key = jax.random.PRNGKey(0)
    kx, kb, kc, kd, kbb, kbc, kbd = jax.random.split(key, 7)

    x = jax.random.normal(kx, (B, C, H, W), jnp.float32)

    # Conv2d(C, C, 1) parameters (deterministic synthetic init).
    bound = 1.0 / jnp.sqrt(C)
    wb = jax.random.uniform(kb, (C, C, 1, 1), jnp.float32, -bound, bound)
    wc = jax.random.uniform(kc, (C, C, 1, 1), jnp.float32, -bound, bound)
    wd = jax.random.uniform(kd, (C, C, 1, 1), jnp.float32, -bound, bound)
    bb = jax.random.uniform(kbb, (C,), jnp.float32, -bound, bound)
    bc = jax.random.uniform(kbc, (C,), jnp.float32, -bound, bound)
    bd = jax.random.uniform(kbd, (C,), jnp.float32, -bound, bound)

    # Faithful to nn.Parameter(torch.zeros(1)).
    alpha0 = jnp.zeros((1,), jnp.float32)
    out = position_attention(x, wb, bb, wc, bc, wd, bd, alpha0)
    jax.block_until_ready(out)
    ref = _reference(x, wb, bb, wc, bc, wd, bd, alpha0[0])
    assert jnp.allclose(out, ref, rtol=1e-5, atol=1e-5)

    # Nonzero alpha exercises the attention path numerically
    # (looser tolerance: approx reciprocal in the softmax normalization).
    alpha1 = jnp.array([0.5], jnp.float32)
    out1 = position_attention(x, wb, bb, wc, bc, wd, bd, alpha1)
    jax.block_until_ready(out1)
    ref1 = _reference(x, wb, bb, wc, bc, wd, bd, alpha1[0])
    assert jnp.allclose(out1, ref1, rtol=5e-3, atol=5e-3)

    print("KERNEL_OK")
</pallas_src>

<mosaic_0001>
module attributes {stable_mosaic.version = 11 : i64} {
  func.func @_pam_kernel(%arg0: i32, %arg1: i32, %arg2: i32, %arg3: memref<1x8x128xf32, #tpu.memory_space<vmem>>, %arg4: memref<1x8x128xf32, #tpu.memory_space<vmem>>, %arg5: memref<8x8xf32, #tpu.memory_space<vmem>>, %arg6: memref<8x1xf32, #tpu.memory_space<vmem>>, %arg7: memref<16x8xf32, #tpu.memory_space<vmem>>, %arg8: memref<16x1xf32, #tpu.memory_space<vmem>>, %arg9: memref<1x1xf32, #tpu.memory_space<smem>>, %arg10: memref<1x8x128xf32, #tpu.memory_space<vmem>>, %arg11: memref<8x128xf32, #tpu.memory_space<vmem>>, %arg12: memref<1x128xf32, #tpu.memory_space<vmem>>, %arg13: memref<1x128xf32, #tpu.memory_space<vmem>>, %arg14: memref<8x128xf32, #tpu.memory_space<vmem>>) attributes {dimension_semantics = [#tpu.dimension_semantics<parallel>, #tpu.dimension_semantics<parallel>, #tpu.dimension_semantics<arbitrary>], iteration_bounds = array<i64: 2, 2, 2>, scalar_prefetch = 0 : i64, scratch_operands = 4 : i64, tpu.core_type = #tpu.core_type<tc>, window_params = [{transform_indices = @transform_0, window_bounds = array<i64: 1, 8, 128>}, {transform_indices = @transform_1, window_bounds = array<i64: 1, 8, 128>}, {pipeline_mode = #tpu.pipeline_mode<synchronous>, transform_indices = @transform_2, window_bounds = array<i64: 8, 8>}, {pipeline_mode = #tpu.pipeline_mode<synchronous>, transform_indices = @transform_3, window_bounds = array<i64: 8, 1>}, {pipeline_mode = #tpu.pipeline_mode<synchronous>, transform_indices = @transform_4, window_bounds = array<i64: 16, 8>}, {pipeline_mode = #tpu.pipeline_mode<synchronous>, transform_indices = @transform_5, window_bounds = array<i64: 16, 1>}, {transform_indices = @transform_6, window_bounds = array<i64: 1, 1>}, {transform_indices = @transform_7, window_bounds = array<i64: 1, 8, 128>}]} {
    %c0_i32 = arith.constant 0 : i32
    %0 = arith.cmpi eq, %arg2, %c0_i32 : i32
    %1 = arith.extui %0 : i1 to i32
    %c0_i32_0 = arith.constant 0 : i32
    %2 = arith.cmpi ne, %1, %c0_i32_0 : i32
    scf.if %2 {
      %c0_26 = arith.constant 0 : index
      %c0_27 = arith.constant 0 : index
      %c0_28 = arith.constant 0 : index
      %39 = vector.load %arg3[%c0_26, %c0_27, %c0_28] : memref<1x8x128xf32, #tpu.memory_space<vmem>>, vector<1x8x128xf32>
      %40 = vector.shape_cast %39 : vector<1x8x128xf32> to vector<8x128xf32>
      %c0_29 = arith.constant 0 : index
      %c0_30 = arith.constant 0 : index
      %41 = vector.load %arg5[%c0_29, %c0_30] : memref<8x8xf32, #tpu.memory_space<vmem>>, vector<8x8xf32>
      %cst_31 = arith.constant dense<0.000000e+00> : vector<8x128xf32>
      %42 = tpu.matmul %41, %40, %cst_31 {dimension_numbers = #tpu.dot_dimension_numbers<[1], [0], [0], [1], [0, 0, 1, 1], [], []>} : vector<8x8xf32>, vector<8x128xf32>, vector<8x128xf32> -> vector<8x128xf32>
      %c0_32 = arith.constant 0 : index
      %c0_33 = arith.constant 0 : index
      %43 = vector.load %arg6[%c0_32, %c0_33] : memref<8x1xf32, #tpu.memory_space<vmem>>, vector<8x1xf32>
      %44 = vector.broadcast %43 : vector<8x1xf32> to vector<8x128xf32>
      %45 = arith.addf %42, %44 : vector<8x128xf32>
      %c0_34 = arith.constant 0 : index
      %c0_35 = arith.constant 0 : index
      %46 = vector.load %arg11[%c0_34, %c0_35] : memref<8x128xf32, #tpu.memory_space<vmem>>, vector<8x128xf32>
      tpu.vector_store %arg11[%c0_34, %c0_35], %45 {strides = array<i32>} : memref<8x128xf32, #tpu.memory_space<vmem>>, vector<8x128xf32>,
      %cst_36 = arith.constant 0xFF800000 : f32
      %47 = vector.broadcast %cst_36 : f32 to vector<1x128xf32>
      %c0_37 = arith.constant 0 : index
      %c0_38 = arith.constant 0 : index
      %48 = vector.load %arg12[%c0_37, %c0_38] : memref<1x128xf32, #tpu.memory_space<vmem>>, vector<1x128xf32>
      tpu.vector_store %arg12[%c0_37, %c0_38], %47 {strides = array<i32>} : memref<1x128xf32, #tpu.memory_space<vmem>>, vector<1x128xf32>,
      %cst_39 = arith.constant 0.000000e+00 : f32
      %49 = vector.broadcast %cst_39 : f32 to vector<1x128xf32>
      %c0_40 = arith.constant 0 : index
      %c0_41 = arith.constant 0 : index
      %50 = vector.load %arg13[%c0_40, %c0_41] : memref<1x128xf32, #tpu.memory_space<vmem>>, vector<1x128xf32>
      tpu.vector_store %arg13[%c0_40, %c0_41], %49 {strides = array<i32>} : memref<1x128xf32, #tpu.memory_space<vmem>>, vector<1x128xf32>,
      %cst_42 = arith.constant 0.000000e+00 : f32
      %51 = vector.broadcast %cst_42 : f32 to vector<8x128xf32>
      %c0_43 = arith.constant 0 : index
      %c0_44 = arith.constant 0 : index
      %52 = vector.load %arg14[%c0_43, %c0_44] : memref<8x128xf32, #tpu.memory_space<vmem>>, vector<8x128xf32>
      tpu.vector_store %arg14[%c0_43, %c0_44], %51 {strides = array<i32>} : memref<8x128xf32, #tpu.memory_space<vmem>>, vector<8x128xf32>,
    } else {
    }
    %c0 = arith.constant 0 : index
    %c0_1 = arith.constant 0 : index
    %c0_2 = arith.constant 0 : index
    %3 = vector.load %arg4[%c0, %c0_1, %c0_2] : memref<1x8x128xf32, #tpu.memory_space<vmem>>, vector<1x8x128xf32>
    %4 = vector.shape_cast %3 : vector<1x8x128xf32> to vector<8x128xf32>
    %c0_3 = arith.constant 0 : index
    %c0_4 = arith.constant 0 : index
    %5 = vector.load %arg7[%c0_3, %c0_4] : memref<16x8xf32, #tpu.memory_space<vmem>>, vector<16x8xf32>
    %cst = arith.constant dense<0.000000e+00> : vector<16x128xf32>
    %6 = tpu.matmul %5, %4, %cst {dimension_numbers = #tpu.dot_dimension_numbers<[1], [0], [0], [1], [0, 0, 1, 1], [], []>} : vector<16x8xf32>, vector<8x128xf32>, vector<16x128xf32> -> vector<16x128xf32>
    %c0_5 = arith.constant 0 : index
    %c0_6 = arith.constant 0 : index
    %7 = vector.load %arg8[%c0_5, %c0_6] : memref<16x1xf32, #tpu.memory_space<vmem>>, vector<16x1xf32>
    %8 = vector.broadcast %7 : vector<16x1xf32> to vector<16x128xf32>
    %9 = arith.addf %6, %8 : vector<16x128xf32>
    %10 = vector.extract_strided_slice %9 {offsets = [0, 0], sizes = [8, 128], strides = [1, 1]} : vector<16x128xf32> to vector<8x128xf32>
    %11 = vector.extract_strided_slice %9 {offsets = [8, 0], sizes = [8, 128], strides = [1, 1]} : vector<16x128xf32> to vector<8x128xf32>
    %c0_7 = arith.constant 0 : index
    %c0_8 = arith.constant 0 : index
    %12 = vector.load %arg11[%c0_7, %c0_8] : memref<8x128xf32, #tpu.memory_space<vmem>>, vector<8x128xf32>
    %cst_9 = arith.constant dense<0.000000e+00> : vector<128x128xf32>
    %13 = tpu.matmul %10, %12, %cst_9 {dimension_numbers = #tpu.dot_dimension_numbers<[0], [0], [1], [1], [0, 1, 1, 1], [], []>} : vector<8x128xf32>, vector<8x128xf32>, vector<128x128xf32> -> vector<128x128xf32>
    %c0_10 = arith.constant 0 : index
    %c0_11 = arith.constant 0 : index
    %14 = vector.load %arg12[%c0_10, %c0_11] : memref<1x128xf32, #tpu.memory_space<vmem>>, vector<1x128xf32>
    %cst_12 = arith.constant dense<0xFF800000> : vector<128xf32>
    %15 = vector.multi_reduction <maximumf>, %13, %cst_12 [0] : vector<128x128xf32> to vector<128xf32>
    %16 = vector.shape_cast %15 : vector<128xf32> to vector<1x128xf32>
    %17 = arith.maximumf %14, %16 : vector<1x128xf32>
    %18 = arith.subf %14, %17 : vector<1x128xf32>
    %19 = math.exp %18 : vector<1x128xf32>
    %20 = vector.broadcast %17 : vector<1x128xf32> to vector<128x128xf32>
    %21 = arith.subf %13, %20 : vector<128x128xf32>
    %22 = math.exp %21 : vector<128x128xf32>
    %c0_13 = arith.constant 0 : index
    %c0_14 = arith.constant 0 : index
    %23 = vector.load %arg13[%c0_13, %c0_14] : memref<1x128xf32, #tpu.memory_space<vmem>>, vector<1x128xf32>
    %24 = arith.mulf %19, %23 : vector<1x128xf32>
    %cst_15 = arith.constant dense<0.000000e+00> : vector<128xf32>
    %25 = vector.multi_reduction <add>, %22, %cst_15 [0] : vector<128x128xf32> to vector<128xf32>
    %26 = vector.shape_cast %25 : vector<128xf32> to vector<1x128xf32>
    %27 = arith.addf %24, %26 : vector<1x128xf32>
    %c0_16 = arith.constant 0 : index
    %c0_17 = arith.constant 0 : index
    %28 = vector.load %arg13[%c0_16, %c0_17] : memref<1x128xf32, #tpu.memory_space<vmem>>, vector<1x128xf32>
    tpu.vector_store %arg13[%c0_16, %c0_17], %27 {strides = array<i32>} : memref<1x128xf32, #tpu.memory_space<vmem>>, vector<1x128xf32>,
    %c0_18 = arith.constant 0 : index
    %c0_19 = arith.constant 0 : index
    %29 = vector.load %arg14[%c0_18, %c0_19] : memref<8x128xf32, #tpu.memory_space<vmem>>, vector<8x128xf32>
    %30 = vector.broadcast %19 : vector<1x128xf32> to vector<8x128xf32>
    %31 = arith.mulf %30, %29 : vector<8x128xf32>
    %cst_20 = arith.constant dense<0.000000e+00> : vector<8x128xf32>
    %32 = tpu.matmul %11, %22, %cst_20 {dimension_numbers = #tpu.dot_dimension_numbers<[1], [0], [0], [1], [0, 0, 1, 1], [], []>} : vector<8x128xf32>, vector<128x128xf32>, vector<8x128xf32> -> vector<8x128xf32>
    %33 = arith.addf %31, %32 : vector<8x128xf32>
    %c0_21 = arith.constant 0 : index
    %c0_22 = arith.constant 0 : index
    %34 = vector.load %arg14[%c0_21, %c0_22] : memref<8x128xf32, #tpu.memory_space<vmem>>, vector<8x128xf32>
    tpu.vector_store %arg14[%c0_21, %c0_22], %33 {strides = array<i32>} : memref<8x128xf32, #tpu.memory_space<vmem>>, vector<8x128xf32>,
    %c0_23 = arith.constant 0 : index
    %c0_24 = arith.constant 0 : index
    %35 = vector.load %arg12[%c0_23, %c0_24] : memref<1x128xf32, #tpu.memory_space<vmem>>, vector<1x128xf32>
    tpu.vector_store %arg12[%c0_23, %c0_24], %17 {strides = array<i32>} : memref<1x128xf32, #tpu.memory_space<vmem>>, vector<1x128xf32>,
    %c1_i32 = arith.constant 1 : i32
    %36 = arith.cmpi eq, %arg2, %c1_i32 : i32
    %37 = arith.extui %36 : i1 to i32
    %c0_i32_25 = arith.constant 0 : i32
    %38 = arith.cmpi ne, %37, %c0_i32_25 : i32
    scf.if %38 {
      %c0_26 = arith.constant 0 : index
      %c0_27 = arith.constant 0 : index
      %39 = vector.load %arg13[%c0_26, %c0_27] : memref<1x128xf32, #tpu.memory_space<vmem>>, vector<1x128xf32>
      %40 = tpu.reciprocal %39 {approx = true} : vector<1x128xf32> -> vector<1x128xf32>
      %c0_28 = arith.constant 0 : index
      %c0_29 = arith.constant 0 : index
      %41 = memref.load %arg9[%c0_28, %c0_29] : memref<1x1xf32, #tpu.memory_space<smem>>
      %42 = vector.broadcast %41 : f32 to vector<1x128xf32>
      %43 = arith.mulf %42, %40 : vector<1x128xf32>
      %c0_30 = arith.constant 0 : index
      %c0_31 = arith.constant 0 : index
      %44 = vector.load %arg14[%c0_30, %c0_31] : memref<8x128xf32, #tpu.memory_space<vmem>>, vector<8x128xf32>
      %45 = vector.broadcast %43 : vector<1x128xf32> to vector<8x128xf32>
      %46 = arith.mulf %44, %45 : vector<8x128xf32>
      %c0_32 = arith.constant 0 : index
      %c0_33 = arith.constant 0 : index
      %c0_34 = arith.constant 0 : index
      %47 = vector.load %arg3[%c0_32, %c0_33, %c0_34] : memref<1x8x128xf32, #tpu.memory_space<vmem>>, vector<1x8x128xf32>
      %48 = vector.shape_cast %47 : vector<1x8x128xf32> to vector<8x128xf32>
      %49 = arith.addf %46, %48 : vector<8x128xf32>
      %c0_35 = arith.constant 0 : index
      %c0_36 = arith.constant 0 : index
      %c0_37 = arith.constant 0 : index
      %50 = vector.load %arg10[%c0_35, %c0_36, %c0_37] : memref<1x8x128xf32, #tpu.memory_space<vmem>>, vector<1x8x128xf32>
      %51 = vector.shape_cast %50 : vector<1x8x128xf32> to vector<8x128xf32>
      %52 = vector.shape_cast %49 : vector<8x128xf32> to vector<1x8x128xf32>
      tpu.vector_store %arg10[%c0_35, %c0_36, %c0_37], %52 {strides = array<i32>} : memref<1x8x128xf32, #tpu.memory_space<vmem>>, vector<1x8x128xf32>,
    } else {
    }
    return
  }
  func.func @transform_0(%arg0: i32, %arg1: i32, %arg2: i32) -> (i32, i32, i32) {
    %c0_i32 = arith.constant 0 : i32
    %c0_i32_0 = arith.constant 0 : i32
    return %arg0, %c0_i32, %arg1 : i32, i32, i32
  }
  func.func @transform_1(%arg0: i32, %arg1: i32, %arg2: i32) -> (i32, i32, i32) {
    %c0_i32 = arith.constant 0 : i32
    %c0_i32_0 = arith.constant 0 : i32
    return %arg0, %c0_i32, %arg2 : i32, i32, i32
  }
  func.func @transform_2(%arg0: i32, %arg1: i32, %arg2: i32) -> (i32, i32) {
    %c0_i32 = arith.constant 0 : i32
    %c0_i32_0 = arith.constant 0 : i32
    %c0_i32_1 = arith.constant 0 : i32
    return %c0_i32, %c0_i32_0 : i32, i32
  }
  func.func @transform_3(%arg0: i32, %arg1: i32, %arg2: i32) -> (i32, i32) {
    %c0_i32 = arith.constant 0 : i32
    %c0_i32_0 = arith.constant 0 : i32
    %c0_i32_1 = arith.constant 0 : i32
    return %c0_i32, %c0_i32_0 : i32, i32
  }
  func.func @transform_4(%arg0: i32, %arg1: i32, %arg2: i32) -> (i32, i32) {
    %c0_i32 = arith.constant 0 : i32
    %c0_i32_0 = arith.constant 0 : i32
    %c0_i32_1 = arith.constant 0 : i32
    return %c0_i32, %c0_i32_0 : i32, i32
  }
  func.func @transform_5(%arg0: i32, %arg1: i32, %arg2: i32) -> (i32, i32) {
    %c0_i32 = arith.constant 0 : i32
    %c0_i32_0 = arith.constant 0 : i32
    %c0_i32_1 = arith.constant 0 : i32
    return %c0_i32, %c0_i32_0 : i32, i32
  }
  func.func @transform_6(%arg0: i32, %arg1: i32, %arg2: i32) -> (i32, i32) {
    %c0_i32 = arith.constant 0 : i32
    %c0_i32_0 = arith.constant 0 : i32
    %c0_i32_1 = arith.constant 0 : i32
    return %c0_i32, %c0_i32_0 : i32, i32
  }
  func.func @transform_7(%arg0: i32, %arg1: i32, %arg2: i32) -> (i32, i32, i32) {
    %c0_i32 = arith.constant 0 : i32
    %c0_i32_0 = arith.constant 0 : i32
    return %arg0, %c0_i32, %arg1 : i32, i32, i32
  }
}

</mosaic_0001>

<llo_original>
// kernel: position_attention.1
$region0: #{position_attention.1}
  #allocation0 [shape = 'u32[]', space=smem, size = 0x4, offset = 0x4, fixed_abs, tag = 'smem constant byte address 0x4 - core index']
  #allocation1 [shape = 'u32[144,128]{1,0:T(1,128)}', space=vmem, size = 0x12000, scoped, tag = 'internal scratch']
  #allocation2 [shape = 'f32[8,128]{1,0:T(8,128)}', space=vmem, size = 0x1000, scoped, tag = 'scratch operand']
  #allocation3 [shape = 'f32[1,128]{1,0:T(1,128)}', space=vmem, size = 0x200, scoped, tag = 'scratch operand']
  #allocation4 [shape = 'f32[1,128]{1,0:T(1,128)}', space=vmem, size = 0x200, scoped, tag = 'scratch operand']
  #allocation5 [shape = 'f32[8,128]{1,0:T(8,128)}', space=vmem, size = 0x1000, scoped, tag = 'scratch operand']
  #allocation6 [shape = 'f32[1,1]{1,0:T(1,128)S(6)}', space=smem, size = 0x200, scoped, tag = 'scoped memory for position_attention.1']
  %s0 = inlined_call_operand.vmem [shape: f32[2,8,256], index: 0, kind: input, shape index: {}, may-alias: {0,1}]
  %s1 = inlined_call_operand.vmem [shape: f32[2,8,256], index: 1, kind: input, shape index: {}, may-alias: {0,1}]
  %s2 = inlined_call_operand.vmem [shape: f32[8,8], index: 2, kind: input, shape index: {}]
  %s3 = inlined_call_operand.vmem [shape: f32[8,1], index: 3, kind: input, shape index: {}]
  %s4 = inlined_call_operand.vmem [shape: f32[16,8], index: 4, kind: input, shape index: {}]
  %s5 = inlined_call_operand.vmem [shape: f32[16,1], index: 5, kind: input, shape index: {}]
  %s6 = inlined_call_operand.<no memory space> [shape: f32[1,1], index: 6, kind: input, shape index: {}]
  %s7 = inlined_call_operand.vmem [shape: f32[2,8,256], index: 7, kind: output, shape index: {}]
  %s8 = sld [smem:[#allocation0]]
  $region69: #{position_attention.1} parent=0
    _
  %s10 = ssub.s32 1, %s8
  %s11 = scalar_select 0, %s10, %s8
  %12 = sst [smem:[#allocation6]] %s6
  loop: start=0, step=1, limit=10
  $region2: #{position_attention.1} parent=0 // loop_pre_header
    _
  $region3: #{position_attention.1} parent=0 // loop_header
    %s14 = sphi 0, %s18
    %p15 = scmp.ge.s32.totalorder %s14, 10
    %s21 = sphi 0, %s40
    %s22 = sphi 0, %s36
    %s23 = sphi 0, %s32
    %s24 = sphi 0, %s21
    %s25 = sphi 0, %s22
    %s26 = sphi 0, %s23
    %s27 = sphi 0, %s24
    %s28 = sphi 0, %s25
    %s29 = sphi 0, %s26
    %s45 = sphi 0, %s47
    %s48 = sphi 0, %s45
    %s49 = sphi 0, %s48
    %s65 = sphi 0, %s49
    %s73 = sphi 0, %s75
    %s76 = sphi 0, %s73
    %s77 = sphi 0, %s76
    %s93 = sphi 0, %s77
    %s97 = sphi 0, %s97
    %s99 = sphi 0, %s97
    %s100 = sphi 0, %s99
    %s114 = sphi 0, %s100
    %s118 = sphi 0, %s118
    %s120 = sphi 0, %s118
    %s121 = sphi 0, %s120
    %s135 = sphi 0, %s121
    %s139 = sphi 0, %s139
    %s141 = sphi 0, %s139
    %s142 = sphi 0, %s141
    %s156 = sphi 0, %s142
    %s160 = sphi 0, %s160
    %s162 = sphi 0, %s160
    %s163 = sphi 0, %s162
    %s177 = sphi 0, %s163
    %s181 = sphi 0, %s181
    %s183 = sphi 0, %s181
    %s184 = sphi 0, %s183
    %s198 = sphi 0, %s184
    %s206 = sphi 0, %s208
    %s209 = sphi 0, %s206
    %s210 = sphi 0, %s209
    %s226 = sphi 0, %s210
  $region4: #{position_attention.1} parent=0 // loop_header_branch
    %17 = sbr.rel (%p15) target = $region8
  $region5: #{position_attention.1} parent=0 // loop_body
    %s19 = ssub.s32 %s14, 1
    %s20 = ssub.s32 %s14, 2
    %s30 = sadd.s32 1, %s23
    %p31 = scmp.ge.s32.totalorder %s30, 2
    %s32 = scalar_select %p31, 0, %s30
    %s33 = sadd.s32 1, %s22
    %s34 = scalar_select %p31, %s33, %s22
    %p35 = scmp.ge.s32.totalorder %s34, 2
    %s36 = scalar_select %p35, 0, %s34
    %s37 = sadd.s32 1, %s21
    %s38 = scalar_select %p35, %s37, %s21
    %p39 = scmp.ge.s32.totalorder %s38, 2
    %s40 = scalar_select %p39, 0, %s38
    %s41 = ssub.s32 %s21, %s40
    %s42 = ssub.s32 %s22, %s36
    %s43 = sor.u32 %s41, %s42
    %p44 = scmp.eq.s32.totalorder %s43, 0
    %s46 = sadd.s32 %s45, 1
    %s47 = scalar_select %p44, %s45, %s46
    %p50 = pneg %p44
    %p51 = scmp.eq.s32.totalorder %s14, 7
    %p52 = por %p50, %p51
    %p53 = scmp.ne.s32.totalorder %s45, %s48
    %p54 = scmp.eq.s32.totalorder %s14, 0
    %p55 = por %p53, %p54
    %p56 = scmp.ne.s32.totalorder %s45, %s48
    %p57 = scmp.eq.s32.totalorder %s19, 7
    %p58 = por %p56, %p57
    %p59 = scmp.ne.s32.totalorder %s48, %s49
    %p60 = scmp.eq.s32.totalorder %s19, 0
    %p61 = por %p59, %p60
    %p62 = scmp.ne.s32.totalorder %s48, %s49
    %p63 = scmp.eq.s32.totalorder %s20, 7
    %p64 = por %p62, %p63
    %p66 = scmp.ne.s32.totalorder %s49, %s65
    %p67 = scmp.eq.s32.totalorder %s20, 0
    %p68 = por %p66, %p67
    %s69 = ssub.s32 %s21, %s40
    %s70 = ssub.s32 %s23, %s32
    %s71 = sor.u32 %s69, %s70
    %p72 = scmp.eq.s32.totalorder %s71, 0
    %s74 = sadd.s32 %s73, 1
    %s75 = scalar_select %p72, %s73, %s74
    %p78 = pneg %p72
    %p79 = scmp.eq.s32.totalorder %s14, 7
    %p80 = por %p78, %p79
    %p81 = scmp.ne.s32.totalorder %s73, %s76
    %p82 = scmp.eq.s32.totalorder %s14, 0
    %p83 = por %p81, %p82
    %p84 = scmp.ne.s32.totalorder %s73, %s76
    %p85 = scmp.eq.s32.totalorder %s19, 7
    %p86 = por %p84, %p85
    %p87 = scmp.ne.s32.totalorder %s76, %s77
    %p88 = scmp.eq.s32.totalorder %s19, 0
    %p89 = por %p87, %p88
    %p90 = scmp.ne.s32.totalorder %s76, %s77
    %p91 = scmp.eq.s32.totalorder %s20, 7
    %p92 = por %p90, %p91
    %p94 = scmp.ne.s32.totalorder %s77, %s93
    %p95 = scmp.eq.s32.totalorder %s20, 0
    %p96 = por %p94, %p95
    %s98 = sadd.s32 %s97, 1
    %p101 = scmp.eq.s32.totalorder %s14, 7
    %p102 = scmp.ne.s32.totalorder %s97, %s99
    %p103 = scmp.eq.s32.totalorder %s14, 0
    %p104 = por %p102, %p103
    %p105 = scmp.ne.s32.totalorder %s97, %s99
    %p106 = scmp.eq.s32.totalorder %s19, 7
    %p107 = por %p105, %p106
    %p108 = scmp.ne.s32.totalorder %s99, %s100
    %p109 = scmp.eq.s32.totalorder %s19, 0
    %p110 = por %p108, %p109
    %p111 = scmp.ne.s32.totalorder %s99, %s100
    %p112 = scmp.eq.s32.totalorder %s20, 7
    %p113 = por %p111, %p112
    %p115 = scmp.ne.s32.totalorder %s100, %s114
    %p116 = scmp.eq.s32.totalorder %s20, 0
    %p117 = por %p115, %p116
    %s119 = sadd.s32 %s118, 1
    %p122 = scmp.eq.s32.totalorder %s14, 7
    %p123 = scmp.ne.s32.totalorder %s118, %s120
    %p124 = scmp.eq.s32.totalorder %s14, 0
    %p125 = por %p123, %p124
    %p126 = scmp.ne.s32.totalorder %s118, %s120
    %p127 = scmp.eq.s32.totalorder %s19, 7
    %p128 = por %p126, %p127
    %p129 = scmp.ne.s32.totalorder %s120, %s121
    %p130 = scmp.eq.s32.totalorder %s19, 0
    %p131 = por %p129, %p130
    %p132 = scmp.ne.s32.totalorder %s120, %s121
    %p133 = scmp.eq.s32.totalorder %s20, 7
    %p134 = por %p132, %p133
    %p136 = scmp.ne.s32.totalorder %s121, %s135
    %p137 = scmp.eq.s32.totalorder %s20, 0
    %p138 = por %p136, %p137
    %s140 = sadd.s32 %s139, 1
    %p143 = scmp.eq.s32.totalorder %s14, 7
    %p144 = scmp.ne.s32.totalorder %s139, %s141
    %p145 = scmp.eq.s32.totalorder %s14, 0
    %p146 = por %p144, %p145
    %p147 = scmp.ne.s32.totalorder %s139, %s141
    %p148 = scmp.eq.s32.totalorder %s19, 7
    %p149 = por %p147, %p148
    %p150 = scmp.ne.s32.totalorder %s141, %s142
    %p151 = scmp.eq.s32.totalorder %s19, 0
    %p152 = por %p150, %p151
    %p153 = scmp.ne.s32.totalorder %s141, %s142
    %p154 = scmp.eq.s32.totalorder %s20, 7
    %p155 = por %p153, %p154
    %p157 = scmp.ne.s32.totalorder %s142, %s156
    %p158 = scmp.eq.s32.totalorder %s20, 0
    %p159 = por %p157, %p158
    %s161 = sadd.s32 %s160, 1
    %p164 = scmp.eq.s32.totalorder %s14, 7
    %p165 = scmp.ne.s32.totalorder %s160, %s162
    %p166 = scmp.eq.s32.totalorder %s14, 0
    %p167 = por %p165, %p166
    %p168 = scmp.ne.s32.totalorder %s160, %s162
    %p169 = scmp.eq.s32.totalorder %s19, 7
    %p170 = por %p168, %p169
    %p171 = scmp.ne.s32.totalorder %s162, %s163
    %p172 = scmp.eq.s32.totalorder %s19, 0
    %p173 = por %p171, %p172
    %p174 = scmp.ne.s32.totalorder %s162, %s163
    %p175 = scmp.eq.s32.totalorder %s20, 7
    %p176 = por %p174, %p175
    %p178 = scmp.ne.s32.totalorder %s163, %s177
    %p179 = scmp.eq.s32.totalorder %s20, 0
    %p180 = por %p178, %p179
    %s182 = sadd.s32 %s181, 1
    %p185 = scmp.eq.s32.totalorder %s14, 7
    %p186 = scmp.ne.s32.totalorder %s181, %s183
    %p187 = scmp.eq.s32.totalorder %s14, 0
    %p188 = por %p186, %p187
    %p189 = scmp.ne.s32.totalorder %s181, %s183
    %p190 = scmp.eq.s32.totalorder %s19, 7
    %p191 = por %p189, %p190
    %p192 = scmp.ne.s32.totalorder %s183, %s184
    %p193 = scmp.eq.s32.totalorder %s19, 0
    %p194 = por %p192, %p193
    %p195 = scmp.ne.s32.totalorder %s183, %s184
    %p196 = scmp.eq.s32.totalorder %s20, 7
    %p197 = por %p195, %p196
    %p199 = scmp.ne.s32.totalorder %s184, %s198
    %p200 = scmp.eq.s32.totalorder %s20, 0
    %p201 = por %p199, %p200
    %s202 = ssub.s32 %s21, %s40
    %s203 = ssub.s32 %s22, %s36
    %s204 = sor.u32 %s202, %s203
    %p205 = scmp.eq.s32.totalorder %s204, 0
    %s207 = sadd.s32 %s206, 1
    %s208 = scalar_select %p205, %s206, %s207
    %p211 = pneg %p205
    %p212 = scmp.eq.s32.totalorder %s14, 7
    %p213 = por %p211, %p212
    %p214 = scmp.ne.s32.totalorder %s206, %s209
    %p215 = scmp.eq.s32.totalorder %s14, 0
    %p216 = por %p214, %p215
    %p217 = scmp.ne.s32.totalorder %s206, %s209
    %p218 = scmp.eq.s32.totalorder %s19, 7
    %p219 = por %p217, %p218
    %p220 = scmp.ne.s32.totalorder %s209, %s210
    %p221 = scmp.eq.s32.totalorder %s19, 0
    %p222 = por %p220, %p221
    %p223 = scmp.ne.s32.totalorder %s209, %s210
    %p224 = scmp.eq.s32.totalorder %s20, 7
    %p225 = por %p223, %p224
    %p227 = scmp.ne.s32.totalorder %s210, %s226
    %p228 = scmp.eq.s32.totalorder %s20, 0
    %p229 = por %p227, %p228
    %p230 = scmp.le.s32.totalorder 1, %s14
    %p231 = scmp.lt.s32.totalorder %s14, 9
    %p232 = pnand %p230, %p231
    %p233 = pneg %p232
    // Predicated region
    $region9: #{position_attention.1} parent=5 // pred_check
      _
    $region10: #{position_attention.1} parent=5 // pred_check_branch
      %235 = sbr.rel (%p232) target = $region12
    $region11: #{position_attention.1} parent=5 // pred_region
      %s236 = ssub.s32 %s14, 1
      // Predicated region
      $region13: #{position_attention.1} parent=11 // pred_check
        %p237 = pneg %p110
      $region14: #{position_attention.1} parent=11 // pred_check_branch
        %239 = sbr.rel (%p237) target = $region16
      $region15: #{position_attention.1} parent=11 // pred_region
        _
      $region16: #{position_attention.1} parent=11 // pred_fallthru
        _
      // Predicated region
      $region17: #{position_attention.1} parent=11 // pred_check
        %p240 = pneg %p131
      $region18: #{position_attention.1} parent=11 // pred_check_branch
        %242 = sbr.rel (%p240) target = $region20
      $region19: #{position_attention.1} parent=11 // pred_region
        _
      $region20: #{position_attention.1} parent=11 // pred_fallthru
        _
      // Predicated region
      $region21: #{position_attention.1} parent=11 // pred_check
        %p243 = pneg %p152
      $region22: #{position_attention.1} parent=11 // pred_check_branch
        %245 = sbr.rel (%p243) target = $region24
      $region23: #{position_attention.1} parent=11 // pred_region
        _
      $region24: #{position_attention.1} parent=11 // pred_fallthru
        _
      // Predicated region
      $region25: #{position_attention.1} parent=11 // pred_check
        %p246 = pneg %p173
      $region26: #{position_attention.1} parent=11 // pred_check_branch
        %248 = sbr.rel (%p246) target = $region28
      $region27: #{position_attention.1} parent=11 // pred_region
        _
      $region28: #{position_attention.1} parent=11 // pred_fallthru
        _
      // Predicated region
      $region29: #{position_attention.1} parent=11 // pred_check
        %p249 = pneg %p194
      $region30: #{position_attention.1} parent=11 // pred_check_branch
        %251 = sbr.rel (%p249) target = $region32
      $region31: #{position_attention.1} parent=11 // pred_region
        _
      $region32: #{position_attention.1} parent=11 // pred_fallthru
        _
    $region12: #{position_attention.1} parent=5 // pred_fallthru
      _
    %p252 = scmp.lt.s32.totalorder %s14, 8
    // Predicated region
    $region33: #{position_attention.1} parent=5 // pred_check
      %p253 = pneg %p252
    $region34: #{position_attention.1} parent=5 // pred_check_branch
      %255 = sbr.rel (%p253) target = $region36
    $region35: #{position_attention.1} parent=5 // pred_region
      // Predicated region
      $region37: #{position_attention.1} parent=35 // pred_check
        %p256 = pneg %p55
      $region38: #{position_attention.1} parent=35 // pred_check_branch
        %258 = sbr.rel (%p256) target = $region40
      $region39: #{position_attention.1} parent=35 // pred_region
        %p259 = scmp.lt.s32.totalorder %s21, 1
        %s260 = scalar_select %p259, %s21, 1
        %p261 = scmp.lt.s32.totalorder %s22, 1
        %s262 = scalar_select %p261, %s22, 1
        %s263 = smul.addr %s260, 2
        %s264 = sadd.s32 %s262, %s263
        %s265 = smul.addr %s264, 8
        %s266 = scalar_lea.vmem %s0, %s265
      $region40: #{position_attention.1} parent=35 // pred_fallthru
        _
      // Predicated region
      $region41: #{position_attention.1} parent=35 // pred_check
        %p267 = pneg %p83
      $region42: #{position_attention.1} parent=35 // pred_check_branch
        %269 = sbr.rel (%p267) target = $region44
      $region43: #{position_attention.1} parent=35 // pred_region
        %p270 = scmp.lt.s32.totalorder %s21, 1
        %s271 = scalar_select %p270, %s21, 1
        %p272 = scmp.lt.s32.totalorder %s23, 1
        %s273 = scalar_select %p272, %s23, 1
        %s274 = smul.addr %s271, 2
        %s275 = sadd.s32 %s273, %s274
        %s276 = smul.addr %s275, 8
        %s277 = scalar_lea.vmem %s1, %s276
      $region44: #{position_attention.1} parent=35 // pred_fallthru
        _
    $region36: #{position_attention.1} parent=5 // pred_fallthru
      _
    %p278 = scmp.le.s32.totalorder 1, %s14
    %p279 = scmp.lt.s32.totalorder %s14, 9
    %p280 = pnand %p278, %p279
    %p281 = pneg %p280
    // Predicated region
    $region45: #{position_attention.1} parent=5 // pred_check
      _
    $region46: #{position_attention.1} parent=5 // pred_check_branch
      %283 = sbr.rel (%p280) target = $region48
    $region47: #{position_attention.1} parent=5 // pred_region
      %s284 = ssub.s32 %s14, 1
      %p285 = scmp.lt.s32.totalorder %s24, 1
      %s286 = scalar_select %p285, %s24, 1
      %p287 = scmp.lt.s32.totalorder %s25, 1
      %s288 = scalar_select %p287, %s25, 1
      %s289 = smul.addr %s286, 2
      %s290 = sadd.s32 %s288, %s289
      %s291 = smul.addr %s290, 8
      %s292 = scalar_lea.vmem %s0, %s291
      %p293 = pneg %p61
      %p294 = pneg %p58
      %p295 = scmp.lt.s32.totalorder %s24, 1
      %s296 = scalar_select %p295, %s24, 1
      %p297 = scmp.lt.s32.totalorder %s26, 1
      %s298 = scalar_select %p297, %s26, 1
      %s299 = smul.addr %s296, 2
      %s300 = sadd.s32 %s298, %s299
      %s301 = smul.addr %s300, 8
      %s302 = scalar_lea.vmem %s1, %s301
      %p303 = pneg %p89
      %p304 = pneg %p86
      %p305 = pneg %p110
      %p306 = pneg %p107
      %p307 = pneg %p131
      %p308 = pneg %p128
      %p309 = pneg %p152
      %p310 = pneg %p149
      %p311 = pneg %p173
      %p312 = pneg %p170
      %p313 = pneg %p194
      %p314 = pneg %p191
      %p315 = pneg %p222
      %p316 = pneg %p219
      %p317 = scmp.lt.s32.totalorder %s24, 1
      %s318 = scalar_select %p317, %s24, 1
      %p319 = scmp.lt.s32.totalorder %s25, 1
      %s320 = scalar_select %p319, %s25, 1
      %s321 = smul.addr %s318, 2
      %s322 = sadd.s32 %s320, %s321
      %s323 = smul.addr %s322, 8
      %s324 = scalar_lea.vmem %s7, %s323
      %p325 = scmp.lt.s32.totalorder %s24, 1
      %s326 = scalar_select %p325, %s24, 1
      %p327 = scmp.lt.s32.totalorder %s25, 1
      %s328 = scalar_select %p327, %s25, 1
      %s329 = smul.addr %s326, 2
      %s330 = sadd.s32 %s328, %s329
      %s331 = smul.addr %s330, 8
      %s332 = scalar_lea.vmem %s0, %s331
      %p333 = scmp.lt.s32.totalorder %s24, 1
      %s334 = scalar_select %p333, %s24, 1
      %p335 = scmp.lt.s32.totalorder %s26, 1
      %s336 = scalar_select %p335, %s26, 1
      %s337 = smul.addr %s334, 2
      %s338 = sadd.s32 %s336, %s337
      %s339 = smul.addr %s338, 8
      %s340 = scalar_lea.vmem %s1, %s339
      %p341 = scmp.lt.s32.totalorder %s24, 1
      %s342 = scalar_select %p341, %s24, 1
      %p343 = scmp.lt.s32.totalorder %s25, 1
      %s344 = scalar_select %p343, %s25, 1
      %s345 = smul.addr %s342, 2
      %s346 = sadd.s32 %s344, %s345
      %s347 = smul.addr %s346, 8
      %s348 = scalar_lea.vmem %s7, %s347
      %p349 = scmp.eq.s32.totalorder %s26, 0
      // Predicated region
      $region49: #{position_attention.1} parent=47 // pred_check
        %p350 = pneg %p349
      $region50: #{position_attention.1} parent=47 // pred_check_branch
        %352 = sbr.rel (%p350) target = $region52
      $region51: #{position_attention.1} parent=47 // pred_region
        %v353 = vld [vmem:[%s332] sm:$0xff]
        %v354 = vld [vmem:[%s2] sm:$0xff]
        %v355 = vld [vmem:[%s3] sm:$0xff]
        %357 = vset.pattern.permute.xlu0 0
        %358 = vperm.xlu0 %357, %v355
        %v359 = vpop.permute.xlu0 %358
        %vm361 = vcmask 64512
        %v363 = vsel %vm361, %v354, 0
        %365 = vmatprep.subr.mxu0 0.0
        %366 = vmatpush1.msra.mxu0 %v353
        %367 = vmatprep.subr.mxu0 0.0
        %368 = vmatpush1.msra.mxu0 0.0
        %369 = vmatprep.subr.mxu0 0.0
        %370 = vmatpush1.msra.mxu0 0.0
        %371 = vmatprep.subr.mxu0 0.0
        %372 = vmatpush1.msra.mxu0 0.0
        %373 = vmatprep.subr.mxu0 0.0
        %374 = vmatpush1.msra.mxu0 0.0
        %375 = vmatprep.subr.mxu0 0.0
        %376 = vmatpush1.msra.mxu0 0.0
        %377 = vmatprep.subr.mxu0 0.0
        %378 = vmatpush1.msra.mxu0 0.0
        %379 = vmatprep.subr.mxu0 0.0
        %380 = vmatpush1.msra.mxu0 0.0
        %381 = vmatprep.subr.mxu0 0.0
        %382 = vmatpush1.msra.mxu0 0.0
        %383 = vmatprep.subr.mxu0 0.0
        %384 = vmatpush1.msra.mxu0 0.0
        %385 = vmatprep.subr.mxu0 0.0
        %386 = vmatpush1.msra.mxu0 0.0
        %387 = vmatprep.subr.mxu0 0.0
        %388 = vmatpush1.msra.mxu0 0.0
        %389 = vmatprep.subr.mxu0 0.0
        %390 = vmatpush1.msra.mxu0 0.0
        %391 = vmatprep.subr.mxu0 0.0
        %392 = vmatpush1.msra.mxu0 0.0
        %393 = vmatprep.subr.mxu0 0.0
        %394 = vmatpush1.msra.mxu0 0.0
        %395 = vmatprep.subr.mxu0 0.0
        %396 = vmatpush1.msra.mxu0 0.0
        %397 = vmatprep.subr.mxu0 0.0
        %398 = vmatpush1.msra.mxu0 0.0
        %399 = vmatprep.subr.mxu0 0.0
        %400 = vmatpush1.msra.mxu0 0.0
        %401 = vmatprep.subr.mxu0 0.0
        %402 = vmatpush1.msra.mxu0 0.0
        %403 = vmatprep.subr.mxu0 0.0
        %404 = vmatpush1.msra.mxu0 0.0
        %405 = vmatprep.subr.mxu0 0.0
        %406 = vmatpush1.msra.mxu0 0.0
        %407 = vmatprep.subr.mxu0 0.0
        %408 = vmatpush1.msra.mxu0 0.0
        %409 = vmatprep.subr.mxu0 0.0
        %410 = vmatpush1.msra.mxu0 0.0
        %411 = vmatprep.subr.mxu0 0.0
        %412 = vmatpush1.msra.mxu0 0.0
        %413 = vmatprep.subr.mxu0 0.0
        %414 = vmatpush1.msra.mxu0 0.0
        %415 = vmatprep.subr.mxu0 0.0
        %416 = vmatpush1.msra.mxu0 0.0
        %417 = vmatprep.subr.mxu0 0.0
        %418 = vmatpush1.msra.mxu0 0.0
        %419 = vmatprep.subr.mxu0 0.0
        %420 = vmatpush1.msra.mxu0 0.0
        %421 = vmatprep.subr.mxu0 0.0
        %422 = vmatpush1.msra.mxu0 0.0
        %423 = vmatprep.subr.mxu0 0.0
        %424 = vmatpush1.msra.mxu0 0.0
        %425 = vmatprep.subr.mxu0 0.0
        %426 = vmatpush1.msra.mxu0 0.0
        %427 = vmatprep.subr.mxu0 0.0
        %428 = vmatpush1.msra.mxu0 0.0
        %429 = vmatprep.mubr.f32.mxu0 0.0
        %430 = vmatmul.mubr.f32.gmra.mrb[0].mxu0 %v363
        %v431 = vpop.f32.mrb[0].mxu0
        %v432 = vadd.f32 %v359, %v431
        %v433 = vpop.f32.mrb[0].mxu0
        %434 = vdwg.mxu0
        %435 = vst [vmem:[#allocation2] sm:$0xff] %v432
        %436 = vst [vmem:[#allocation3] sm:$0x1] -inf
        %437 = vst [vmem:[#allocation4] sm:$0x1] 0.0
        %438 = vst [vmem:[#allocation5] sm:$0xff] 0.0
      $region52: #{position_attention.1} parent=47 // pred_fallthru
        _
      %v439 = vld [vmem:[%s340] sm:$0xff]
      %v440 = vld [vmem:[%s4] sm:$0xff]
      %v441 = vld [vmem:[%s4 + $0x8] sm:$0xff]
      %v442 = vld [vmem:[%s5] sm:$0xff]
      %v443 = vld [vmem:[%s5 + $0x8] sm:$0xff]
      %445 = vset.pattern.permute.xlu0 0
      %446 = vperm.xlu0 %445, %v442
      %v447 = vpop.permute.xlu0 %446
      %450 = vset.pattern.permute.xlu0 0
      %451 = vperm.xlu0 %450, %v443
      %v452 = vpop.permute.xlu0 %451
      %vm454 = vcmask 64512
      %v456 = vsel %vm454, %v440, 0
      %v459 = vsel %vm454, %v441, 0
      %461 = vmatprep.subr.mxu0 0.0
      %462 = vmatpush1.msra.mxu0 %v439
      %463 = vmatprep.subr.mxu0 0.0
      %464 = vmatpush1.msra.mxu0 0.0
      %465 = vmatprep.subr.mxu0 0.0
      %466 = vmatpush1.msra.mxu0 0.0
      %467 = vmatprep.subr.mxu0 0.0
      %468 = vmatpush1.msra.mxu0 0.0
      %469 = vmatprep.subr.mxu0 0.0
      %470 = vmatpush1.msra.mxu0 0.0
      %471 = vmatprep.subr.mxu0 0.0
      %472 = vmatpush1.msra.mxu0 0.0
      %473 = vmatprep.subr.mxu0 0.0
      %474 = vmatpush1.msra.mxu0 0.0
      %475 = vmatprep.subr.mxu0 0.0
      %476 = vmatpush1.msra.mxu0 0.0
      %477 = vmatprep.subr.mxu0 0.0
      %478 = vmatpush1.msra.mxu0 0.0
      %479 = vmatprep.subr.mxu0 0.0
      %480 = vmatpush1.msra.mxu0 0.0
      %481 = vmatprep.subr.mxu0 0.0
      %482 = vmatpush1.msra.mxu0 0.0
      %483 = vmatprep.subr.mxu0 0.0
      %484 = vmatpush1.msra.mxu0 0.0
      %485 = vmatprep.subr.mxu0 0.0
      %486 = vmatpush1.msra.mxu0 0.0
      %487 = vmatprep.subr.mxu0 0.0
      %488 = vmatpush1.msra.mxu0 0.0
      %489 = vmatprep.subr.mxu0 0.0
      %490 = vmatpush1.msra.mxu0 0.0
      %491 = vmatprep.subr.mxu0 0.0
      %492 = vmatpush1.msra.mxu0 0.0
      %493 = vmatprep.subr.mxu0 0.0
      %494 = vmatpush1.msra.mxu0 0.0
      %495 = vmatprep.subr.mxu0 0.0
      %496 = vmatpush1.msra.mxu0 0.0
      %497 = vmatprep.subr.mxu0 0.0
      %498 = vmatpush1.msra.mxu0 0.0
      %499 = vmatprep.subr.mxu0 0.0
      %500 = vmatpush1.msra.mxu0 0.0
      %501 = vmatprep.subr.mxu0 0.0
      %502 = vmatpush1.msra.mxu0 0.0
      %503 = vmatprep.subr.mxu0 0.0
      %504 = vmatpush1.msra.mxu0 0.0
      %505 = vmatprep.subr.mxu0 0.0
      %506 = vmatpush1.msra.mxu0 0.0
      %507 = vmatprep.subr.mxu0 0.0
      %508 = vmatpush1.msra.mxu0 0.0
      %509 = vmatprep.subr.mxu0 0.0
      %510 = vmatpush1.msra.mxu0 0.0
      %511 = vmatprep.subr.mxu0 0.0
      %512 = vmatpush1.msra.mxu0 0.0
      %513 = vmatprep.subr.mxu0 0.0
      %514 = vmatpush1.msra.mxu0 0.0
      %515 = vmatprep.subr.mxu0 0.0
      %516 = vmatpush1.msra.mxu0 0.0
      %517 = vmatprep.subr.mxu0 0.0
      %518 = vmatpush1.msra.mxu0 0.0
      %519 = vmatprep.subr.mxu0 0.0
      %520 = vmatpush1.msra.mxu0 0.0
      %521 = vmatprep.subr.mxu0 0.0
      %522 = vmatpush1.msra.mxu0 0.0
      %523 = vmatprep.subr.mxu0 0.0
      %524 = vmatpush1.msra.mxu0 0.0
      %525 = vmatprep.mubr.f32.mxu0 0.0
      %526 = vmatmul.mubr.f32.gmra.mrb[0].mxu0 %v456
      %v527 = vpop.f32.mrb[0].mxu0
      %v528 = vadd.f32 %v447, %v527
      %v529 = vpop.f32.mrb[0].mxu0
      %530 = vmatprep.mubr.f32.mxu0 0.0
      %531 = vmatmul.mubr.f32.gmra.mrb[0].mxu0 %v459
      %v532 = vpop.f32.mrb[0].mxu0
      %v533 = vadd.f32 %v452, %v532
      %v534 = vpop.f32.mrb[0].mxu0
      %535 = vdwg.mxu0
      %v536 = vld [vmem:[#allocation2] sm:$0xff]
      %537 = vxpose.xlu0.b32.start [1/16] %v528, 128
      %538 = vxpose.xlu0.b32.cont [2/16] 0.0, 128
      %539 = vxpose.xlu0.b32.cont [3/16] 0.0, 128
      %540 = vxpose.xlu0.b32.cont [4/16] 0.0, 128
      %541 = vxpose.xlu0.b32.cont [5/16] 0.0, 128
      %542 = vxpose.xlu0.b32.cont [6/16] 0.0, 128
      %543 = vxpose.xlu0.b32.cont [7/16] 0.0, 128
      %544 = vxpose.xlu0.b32.cont [8/16] 0.0, 128
      %545 = vxpose.xlu0.b32.cont [9/16] 0.0, 128
      %546 = vxpose.xlu0.b32.cont [10/16] 0.0, 128
      %547 = vxpose.xlu0.b32.cont [11/16] 0.0, 128
      %548 = vxpose.xlu0.b32.cont [12/16] 0.0, 128
      %549 = vxpose.xlu0.b32.cont [13/16] 0.0, 128
      %550 = vxpose.xlu0.b32.cont [14/16] 0.0, 128
      %551 = vxpose.xlu0.b32.cont [15/16] 0.0, 128
      %552 = vxpose.xlu0.b32.end [16/16] 0.0, 128
      %v553 = vpop.trf.xlu0
      %v554 = vpop.trf.xlu0
      %v555 = vpop.trf.xlu0
      %v556 = vpop.trf.xlu0
      %v557 = vpop.trf.xlu0
      %v558 = vpop.trf.xlu0
      %v559 = vpop.trf.xlu0
      %v560 = vpop.trf.xlu0
      %v561 = vpop.trf.xlu0
      %v562 = vpop.trf.xlu0
      %v563 = vpop.trf.xlu0
      %v564 = vpop.trf.xlu0
      %v565 = vpop.trf.xlu0
      %v566 = vpop.trf.xlu0
      %v567 = vpop.trf.xlu0
      %v568 = vpop.trf.xlu0
      %v570 = vsel %vm454, %v553, 0
      %v573 = vsel %vm454, %v554, 0
      %v576 = vsel %vm454, %v555, 0
      %v579 = vsel %vm454, %v556, 0
      %v582 = vsel %vm454, %v557, 0
      %v585 = vsel %vm454, %v558, 0
      %v588 = vsel %vm454, %v559, 0
      %v591 = vsel %vm454, %v560, 0
      %v594 = vsel %vm454, %v561, 0
      %v597 = vsel %vm454, %v562, 0
      %v600 = vsel %vm454, %v563, 0
      %v603 = vsel %vm454, %v564, 0
      %v606 = vsel %vm454, %v565, 0
      %v609 = vsel %vm454, %v566, 0
      %v612 = vsel %vm454, %v567, 0
      %v615 = vsel %vm454, %v568, 0
      %617 = vmatprep.subr.mxu0 0.0
      %618 = vmatpush1.msra.mxu0 %v536
      %619 = vmatprep.subr.mxu0 0.0
      %620 = vmatpush1.msra.mxu0 0.0
      %621 = vmatprep.subr.mxu0 0.0
      %622 = vmatpush1.msra.mxu0 0.0
      %623 = vmatprep.subr.mxu0 0.0
      %624 = vmatpush1.msra.mxu0 0.0
      %625 = vmatprep.subr.mxu0 0.0
      %626 = vmatpush1.msra.mxu0 0.0
      %627 = vmatprep.subr.mxu0 0.0
      %628 = vmatpush1.msra.mxu0 0.0
      %629 = vmatprep.subr.mxu0 0.0
      %630 = vmatpush1.msra.mxu0 0.0
      %631 = vmatprep.subr.mxu0 0.0
      %632 = vmatpush1.msra.mxu0 0.0
      %633 = vmatprep.subr.mxu0 0.0
      %634 = vmatpush1.msra.mxu0 0.0
      %635 = vmatprep.subr.mxu0 0.0
      %636 = vmatpush1.msra.mxu0 0.0
      %637 = vmatprep.subr.mxu0 0.0
      %638 = vmatpush1.msra.mxu0 0.0
      %639 = vmatprep.subr.mxu0 0.0
      %640 = vmatpush1.msra.mxu0 0.0
      %641 = vmatprep.subr.mxu0 0.0
      %642 = vmatpush1.msra.mxu0 0.0
      %643 = vmatprep.subr.mxu0 0.0
      %644 = vmatpush1.msra.mxu0 0.0
      %645 = vmatprep.subr.mxu0 0.0
      %646 = vmatpush1.msra.mxu0 0.0
      %647 = vmatprep.subr.mxu0 0.0
      %648 = vmatpush1.msra.mxu0 0.0
      %649 = vmatprep.subr.mxu0 0.0
      %650 = vmatpush1.msra.mxu0 0.0
      %651 = vmatprep.subr.mxu0 0.0
      %652 = vmatpush1.msra.mxu0 0.0
      %653 = vmatprep.subr.mxu0 0.0
      %654 = vmatpush1.msra.mxu0 0.0
      %655 = vmatprep.subr.mxu0 0.0
      %656 = vmatpush1.msra.mxu0 0.0
      %657 = vmatprep.subr.mxu0 0.0
      %658 = vmatpush1.msra.mxu0 0.0
      %659 = vmatprep.subr.mxu0 0.0
      %660 = vmatpush1.msra.mxu0 0.0
      %661 = vmatprep.subr.mxu0 0.0
      %662 = vmatpush1.msra.mxu0 0.0
      %663 = vmatprep.subr.mxu0 0.0
      %664 = vmatpush1.msra.mxu0 0.0
      %665 = vmatprep.subr.mxu0 0.0
      %666 = vmatpush1.msra.mxu0 0.0
      %667 = vmatprep.subr.mxu0 0.0
      %668 = vmatpush1.msra.mxu0 0.0
      %669 = vmatprep.subr.mxu0 0.0
      %670 = vmatpush1.msra.mxu0 0.0
      %671 = vmatprep.subr.mxu0 0.0
      %672 = vmatpush1.msra.mxu0 0.0
      %673 = vmatprep.subr.mxu0 0.0
      %674 = vmatpush1.msra.mxu0 0.0
      %675 = vmatprep.subr.mxu0 0.0
      %676 = vmatpush1.msra.mxu0 0.0
      %677 = vmatprep.subr.mxu0 0.0
      %678 = vmatpush1.msra.mxu0 0.0
      %679 = vmatprep.subr.mxu0 0.0
      %680 = vmatpush1.msra.mxu0 0.0
      %681 = vmatprep.mubr.f32.mxu0 0.0
      %682 = vmatmul.mubr.f32.gmra.mrb[0].mxu0 %v570
      %v683 = vpop.f32.mrb[0].mxu0
      %v684 = vadd.f32 0.0, %v683
      %v685 = vpop.f32.mrb[0].mxu0
      %686 = vmatprep.mubr.f32.mxu0 0.0
      %687 = vmatmul.mubr.f32.gmra.mrb[0].mxu0 %v573
      %v688 = vpop.f32.mrb[0].mxu0
      %v689 = vadd.f32 0.0, %v688
      %v690 = vpop.f32.mrb[0].mxu0
      %691 = vmatprep.mubr.f32.mxu0 0.0
      %692 = vmatmul.mubr.f32.gmra.mrb[0].mxu0 %v576
      %v693 = vpop.f32.mrb[0].mxu0
      %v694 = vadd.f32 0.0, %v693
      %v695 = vpop.f32.mrb[0].mxu0
      %696 = vmatprep.mubr.f32.mxu0 0.0
      %697 = vmatmul.mubr.f32.gmra.mrb[0].mxu0 %v579
      %v698 = vpop.f32.mrb[0].mxu0
      %v699 = vadd.f32 0.0, %v698
      %v700 = vpop.f32.mrb[0].mxu0
      %701 = vmatprep.mubr.f32.mxu0 0.0
      %702 = vmatmul.mubr.f32.gmra.mrb[0].mxu0 %v582
      %v703 = vpop.f32.mrb[0].mxu0
      %v704 = vadd.f32 0.0, %v703
      %v705 = vpop.f32.mrb[0].mxu0
      %706 = vmatprep.mubr.f32.mxu0 0.0
      %707 = vmatmul.mubr.f32.gmra.mrb[0].mxu0 %v585
      %v708 = vpop.f32.mrb[0].mxu0
      %v709 = vadd.f32 0.0, %v708
      %v710 = vpop.f32.mrb[0].mxu0
      %711 = vmatprep.mubr.f32.mxu0 0.0
      %712 = vmatmul.mubr.f32.gmra.mrb[0].mxu0 %v588
      %v713 = vpop.f32.mrb[0].mxu0
      %v714 = vadd.f32 0.0, %v713
      %v715 = vpop.f32.mrb[0].mxu0
      %716 = vmatprep.mubr.f32.mxu0 0.0
      %717 = vmatmul.mubr.f32.gmra.mrb[0].mxu0 %v591
      %v718 = vpop.f32.mrb[0].mxu0
      %v719 = vadd.f32 0.0, %v718
      %v720 = vpop.f32.mrb[0].mxu0
      %721 = vmatprep.mubr.f32.mxu0 0.0
      %722 = vmatmul.mubr.f32.gmra.mrb[0].mxu0 %v594
      %v723 = vpop.f32.mrb[0].mxu0
      %v724 = vadd.f32 0.0, %v723
      %v725 = vpop.f32.mrb[0].mxu0
      %726 = vmatprep.mubr.f32.mxu0 0.0
      %727 = vmatmul.mubr.f32.gmra.mrb[0].mxu0 %v597
      %v728 = vpop.f32.mrb[0].mxu0
      %v729 = vadd.f32 0.0, %v728
      %v730 = vpop.f32.mrb[0].mxu0
      %731 = vmatprep.mubr.f32.mxu0 0.0
      %732 = vmatmul.mubr.f32.gmra.mrb[0].mxu0 %v600
      %v733 = vpop.f32.mrb[0].mxu0
      %v734 = vadd.f32 0.0, %v733
      %v735 = vpop.f32.mrb[0].mxu0
      %736 = vmatprep.mubr.f32.mxu0 0.0
      %737 = vmatmul.mubr.f32.gmra.mrb[0].mxu0 %v603
      %v738 = vpop.f32.mrb[0].mxu0
      %v739 = vadd.f32 0.0, %v738
      %v740 = vpop.f32.mrb[0].mxu0
      %741 = vmatprep.mubr.f32.mxu0 0.0
      %742 = vmatmul.mubr.f32.gmra.mrb[0].mxu0 %v606
      %v743 = vpop.f32.mrb[0].mxu0
      %v744 = vadd.f32 0.0, %v743
      %v745 = vpop.f32.mrb[0].mxu0
      %746 = vmatprep.mubr.f32.mxu0 0.0
      %747 = vmatmul.mubr.f32.gmra.mrb[0].mxu0 %v609
      %v748 = vpop.f32.mrb[0].mxu0
      %v749 = vadd.f32 0.0, %v748
      %v750 = vpop.f32.mrb[0].mxu0
      %751 = vmatprep.mubr.f32.mxu0 0.0
      %752 = vmatmul.mubr.f32.gmra.mrb[0].mxu0 %v612
      %v753 = vpop.f32.mrb[0].mxu0
      %v754 = vadd.f32 0.0, %v753
      %v755 = vpop.f32.mrb[0].mxu0
      %756 = vmatprep.mubr.f32.mxu0 0.0
      %757 = vmatmul.mubr.f32.gmra.mrb[0].mxu0 %v615
      %v758 = vpop.f32.mrb[0].mxu0
      %v759 = vadd.f32 0.0, %v758
      %v760 = vpop.f32.mrb[0].mxu0
      %761 = vdwg.mxu0
      %v762 = vld [vmem:[#allocation3] sm:$0x1]
      %v763 = vmax.f32 %v684, %v704
      %v764 = vmax.f32 %v689, %v709
      %v765 = vmax.f32 %v694, %v714
      %v766 = vmax.f32 %v699, %v719
      %v767 = vmax.f32 %v763, %v724
      %v768 = vmax.f32 %v764, %v729
      %v769 = vmax.f32 %v765, %v734
      %v770 = vmax.f32 %v766, %v739
      %v771 = vmax.f32 %v767, %v744
      %v772 = vmax.f32 %v768, %v749
      %v773 = vmax.f32 %v769, %v754
      %v774 = vmax.f32 %v770, %v759
      %v775 = vmax.f32 %v771, %v772
      %v776 = vmax.f32 %v773, %v774
      %v777 = vmax.f32 %v775, %v776
      %v778 = vrot.slane %v777, 4
      %v779 = vmax.f32 %v777, %v778
      %v780 = vrot.slane %v779, 2
      %v781 = vmax.f32 %v779, %v780
      %v782 = vrot.slane %v781, 1
      %v783 = vmax.f32 %v781, %v782
      %v784 = vmax.f32 %v762, %v783
      %v785 = vsub.f32 %v762, %v784
      %v786 = vmul.f32 %v785, 1.442695
      %v787 = vpow.pop %v786
      %v789 = vlaneseq
      %v790 = vshrl.u32 %v789, 7
      %v791 = vsub.s32 0, %v790
      %v792 = vrot.slane %v784, %v791
      %v794 = vsub.f32 %v684, %v792
      %v795 = vsub.f32 %v689, %v792
      %v796 = vsub.f32 %v694, %v792
      %v797 = vsub.f32 %v699, %v792
      %v798 = vsub.f32 %v704, %v792
      %v799 = vsub.f32 %v709, %v792
      %v800 = vsub.f32 %v714, %v792
      %v801 = vsub.f32 %v719, %v792
      %v802 = vsub.f32 %v724, %v792
      %v803 = vsub.f32 %v729, %v792
      %v804 = vsub.f32 %v734, %v792
      %v805 = vsub.f32 %v739, %v792
      %v806 = vsub.f32 %v744, %v792
      %v807 = vsub.f32 %v749, %v792
      %v808 = vsub.f32 %v754, %v792
      %v809 = vsub.f32 %v759, %v792
      %v810 = vmul.f32 %v794, 1.442695
      %v811 = vpow.pop %v810
      %v812 = vmul.f32 %v795, 1.442695
      %v813 = vpow.pop %v812
      %v814 = vmul.f32 %v796, 1.442695
      %v815 = vpow.pop %v814
      %v816 = vmul.f32 %v797, 1.442695
      %v817 = vpow.pop %v816
      %v818 = vmul.f32 %v798, 1.442695
      %v819 = vpow.pop %v818
      %v820 = vmul.f32 %v799, 1.442695
      %v821 = vpow.pop %v820
      %v822 = vmul.f32 %v800, 1.442695
      %v823 = vpow.pop %v822
      %v824 = vmul.f32 %v801, 1.442695
      %v825 = vpow.pop %v824
      %v826 = vmul.f32 %v802, 1.442695
      %v827 = vpow.pop %v826
      %v828 = vmul.f32 %v803, 1.442695
      %v829 = vpow.pop %v828
      %v830 = vmul.f32 %v804, 1.442695
      %v831 = vpow.pop %v830
      %v832 = vmul.f32 %v805, 1.442695
      %v833 = vpow.pop %v832
      %v834 = vmul.f32 %v806, 1.442695
      %v835 = vpow.pop %v834
      %v836 = vmul.f32 %v807, 1.442695
      %v837 = vpow.pop %v836
      %v838 = vmul.f32 %v808, 1.442695
      %v839 = vpow.pop %v838
      %v840 = vmul.f32 %v809, 1.442695
      %v841 = vpow.pop %v840
      %v842 = vld [vmem:[#allocation4] sm:$0x1]
      %v843 = vmul.f32 %v787, %v842
      %v844 = vadd.f32 %v811, %v813
      %v845 = vadd.f32 %v844, %v815
      %v846 = vadd.f32 %v845, %v817
      %v847 = vadd.f32 %v846, %v819
      %v848 = vadd.f32 %v847, %v821
      %v849 = vadd.f32 %v848, %v823
      %v850 = vadd.f32 %v849, %v825
      %v851 = vadd.f32 %v850, %v827
      %v852 = vadd.f32 %v851, %v829
      %v853 = vadd.f32 %v852, %v831
      %v854 = vadd.f32 %v853, %v833
      %v855 = vadd.f32 %v854, %v835
      %v856 = vadd.f32 %v855, %v837
      %v857 = vadd.f32 %v856, %v839
      %v858 = vadd.f32 %v857, %v841
      %v859 = vrot.slane %v858, 4
      %v860 = vadd.f32 %v858, %v859
      %v861 = vrot.slane %v860, 2
      %v862 = vadd.f32 %v860, %v861
      %v863 = vrot.slane %v862, 1
      %v864 = vadd.f32 %v862, %v863
      %v865 = vadd.f32 %v843, %v864
      %866 = vst [vmem:[#allocation4] sm:$0x1] %v865
      %v867 = vld [vmem:[#allocation5] sm:$0xff]
      %v869 = vlaneseq
      %v870 = vshrl.u32 %v869, 7
      %v871 = vsub.s32 0, %v870
      %v872 = vrot.slane %v787, %v871
      %v874 = vmul.f32 %v872, %v867
      %875 = vmatprep.subr.mxu0 0.0
      %876 = vmatpush1.msra.mxu0 %v811
      %877 = vmatprep.subr.mxu0 0.0
      %878 = vmatpush1.msra.mxu0 %v813
      %879 = vmatprep.subr.mxu0 0.0
      %880 = vmatpush1.msra.mxu0 %v815
      %881 = vmatprep.subr.mxu0 0.0
      %882 = vmatpush1.msra.mxu0 %v817
      %883 = vmatprep.subr.mxu0 0.0
      %884 = vmatpush1.msra.mxu0 %v819
      %885 = vmatprep.subr.mxu0 0.0
      %886 = vmatpush1.msra.mxu0 %v821
      %887 = vmatprep.subr.mxu0 0.0
      %888 = vmatpush1.msra.mxu0 %v823
      %889 = vmatprep.subr.mxu0 0.0
      %890 = vmatpush1.msra.mxu0 %v825
      %891 = vmatprep.subr.mxu0 0.0
      %892 = vmatpush1.msra.mxu0 %v827
      %893 = vmatprep.subr.mxu0 0.0
      %894 = vmatpush1.msra.mxu0 %v829
      %895 = vmatprep.subr.mxu0 0.0
      %896 = vmatpush1.msra.mxu0 %v831
      %897 = vmatprep.subr.mxu0 0.0
      %898 = vmatpush1.msra.mxu0 %v833
      %899 = vmatprep.subr.mxu0 0.0
      %900 = vmatpush1.msra.mxu0 %v835
      %901 = vmatprep.subr.mxu0 0.0
      %902 = vmatpush1.msra.mxu0 %v837
      %903 = vmatprep.subr.mxu0 0.0
      %904 = vmatpush1.msra.mxu0 %v839
      %905 = vmatprep.subr.mxu0 0.0
      %906 = vmatpush1.msra.mxu0 %v841
      %907 = vmatprep.subr.mxu0 0.0
      %908 = vmatpush1.msra.mxu0 0.0
      %909 = vmatprep.subr.mxu0 0.0
      %910 = vmatpush1.msra.mxu0 0.0
      %911 = vmatprep.subr.mxu0 0.0
      %912 = vmatpush1.msra.mxu0 0.0
      %913 = vmatprep.subr.mxu0 0.0
      %914 = vmatpush1.msra.mxu0 0.0
      %915 = vmatprep.subr.mxu0 0.0
      %916 = vmatpush1.msra.mxu0 0.0
      %917 = vmatprep.subr.mxu0 0.0
      %918 = vmatpush1.msra.mxu0 0.0
      %919 = vmatprep.subr.mxu0 0.0
      %920 = vmatpush1.msra.mxu0 0.0
      %921 = vmatprep.subr.mxu0 0.0
      %922 = vmatpush1.msra.mxu0 0.0
      %923 = vmatprep.subr.mxu0 0.0
      %924 = vmatpush1.msra.mxu0 0.0
      %925 = vmatprep.subr.mxu0 0.0
      %926 = vmatpush1.msra.mxu0 0.0
      %927 = vmatprep.subr.mxu0 0.0
      %928 = vmatpush1.msra.mxu0 0.0
      %929 = vmatprep.subr.mxu0 0.0
      %930 = vmatpush1.msra.mxu0 0.0
      %931 = vmatprep.subr.mxu0 0.0
      %932 = vmatpush1.msra.mxu0 0.0
      %933 = vmatprep.subr.mxu0 0.0
      %934 = vmatpush1.msra.mxu0 0.0
      %935 = vmatprep.subr.mxu0 0.0
      %936 = vmatpush1.msra.mxu0 0.0
      %937 = vmatprep.subr.mxu0 0.0
      %938 = vmatpush1.msra.mxu0 0.0
      %939 = vmatprep.mubr.f32.mxu0 0.0
      %940 = vmatmul.mubr.f32.gmra.mrb[0].mxu0 %v533
      %v941 = vpop.f32.mrb[0].mxu0
      %v942 = vadd.f32 0.0, %v941
      %v943 = vpop.f32.mrb[0].mxu0
      %944 = vdwg.mxu0
      %v945 = vadd.f32 %v874, %v942
      %946 = vst [vmem:[#allocation5] sm:$0xff] %v945
      %947 = vst [vmem:[#allocation3] sm:$0x1] %v784
      %p948 = scmp.eq.s32.totalorder %s26, 1
      // Predicated region
      $region53: #{position_attention.1} parent=47 // pred_check
        %p949 = pneg %p948
      $region54: #{position_attention.1} parent=47 // pred_check_branch
        %951 = sbr.rel (%p949) target = $region56
      $region55: #{position_attention.1} parent=47 // pred_region
        %v952 = vld [vmem:[#allocation4] sm:$0x1]
        %v953 = vrcp.pop %v952
        %s954 = sld [smem:[#allocation6]]
        %v955 = vstv %s954
        %v956 = vmul.f32 %v955, %v953
        %v957 = vld [vmem:[#allocation5] sm:$0xff]
        %v959 = vlaneseq
        %v960 = vshrl.u32 %v959, 7
        %v961 = vsub.s32 0, %v960
        %v962 = vrot.slane %v956, %v961
        %v964 = vmul.f32 %v957, %v962
        %v965 = vld [vmem:[%s332] sm:$0xff]
        %v966 = vadd.f32 %v964, %v965
        %967 = vst [vmem:[%s348] sm:$0xff] %v966
      $region56: #{position_attention.1} parent=47 // pred_fallthru
        _
      %p968 = scmp.lt.s32.totalorder %s24, 1
      %s969 = scalar_select %p968, %s24, 1
      %p970 = scmp.lt.s32.totalorder %s25, 1
      %s971 = scalar_select %p970, %s25, 1
      %s972 = smul.addr %s969, 2
      %s973 = sadd.s32 %s971, %s972
      %s974 = smul.addr %s973, 8
      %s975 = scalar_lea.vmem %s7, %s974
      // Predicated region
      $region57: #{position_attention.1} parent=47 // pred_check
        %p976 = pneg %p219
      $region58: #{position_attention.1} parent=47 // pred_check_branch
        %978 = sbr.rel (%p976) target = $region60
      $region59: #{position_attention.1} parent=47 // pred_region
        _
      $region60: #{position_attention.1} parent=47 // pred_fallthru
        _
    $region48: #{position_attention.1} parent=5 // pred_fallthru
      _
    %p979 = scmp.le.s32.totalorder 2, %s14
    // Predicated region
    $region61: #{position_attention.1} parent=5 // pred_check
      %p980 = pneg %p979
    $region62: #{position_attention.1} parent=5 // pred_check_branch
      %982 = sbr.rel (%p980) target = $region64
    $region63: #{position_attention.1} parent=5 // pred_region
      %s983 = ssub.s32 %s14, 2
      // Predicated region
      $region65: #{position_attention.1} parent=63 // pred_check
        %p984 = pneg %p225
      $region66: #{position_attention.1} parent=63 // pred_check_branch
        %986 = sbr.rel (%p984) target = $region68
      $region67: #{position_attention.1} parent=63 // pred_region
        %p987 = scmp.lt.s32.totalorder %s27, 1
        %s988 = scalar_select %p987, %s27, 1
        %p989 = scmp.lt.s32.totalorder %s28, 1
        %s990 = scalar_select %p989, %s28, 1
        %s991 = smul.addr %s988, 2
        %s992 = sadd.s32 %s990, %s991
        %s993 = smul.addr %s992, 8
        %s994 = scalar_lea.vmem %s7, %s993
      $region68: #{position_attention.1} parent=63 // pred_fallthru
        _
    $region64: #{position_attention.1} parent=5 // pred_fallthru
      _
  $region6: #{position_attention.1} parent=0 // loop_footer
    %s18 = sadd.s32 1, %s14
  $region7: #{position_attention.1} parent=0 // loop_footer_branch
    %13 = sbr.rel target = $region3
  $region8: #{position_attention.1} parent=0 // loop_exit
    _

</llo_original>
